<compile_context>
chip_gen: v7x
topology: tpu7x:2x2x1
jax: 0.10.0
libtpu: 0.0.40
codegen_flags: <defaults>
</compile_context>

<pallas_src>
import jax
import jax.numpy as jnp
from jax.experimental import pallas as pl
from jax.experimental.pallas import tpu as pltpu


_LANE = 128       # batch tiles sit on the lane axis -> must be a multiple of 128
_TINY_K = 8       # layer-1 contraction dims <= this use the VPU, not the MXU


def _round_up(n, m):
    return ((n + m - 1) // m) * m


def _vmem_budget_bytes():
    """Per-generation VMEM budget (v7x: 64 MiB/TC vs 128 MiB on v5e/v6e)."""
    cap = 64 << 20  # conservative fallback = v7x per-TensorCore VMEM
    try:
        cap = int(getattr(pltpu.get_tpu_info(), "vmem_capacity_bytes", cap))
    except Exception:
        pass
    return (cap * 3) // 4  # leave ~25% headroom for compiler temporaries


def _footprint_bytes(batch, in_dim, hidden, out_dim):
    """Rough VMEM bytes for the gridless single-shot path (f32, sublane-padded)."""
    b = _round_up(batch, _LANE)
    x_b = _round_up(in_dim, 8) * b * 4
    o_b = _round_up(out_dim, 8) * b * 4
    act_b = 2 * _round_up(hidden, 8) * b * 4            # h1 + h2 live sets
    w_b = 4 * (in_dim * hidden + hidden * hidden + hidden * out_dim
               + 2 * hidden + out_dim)
    return x_b + o_b + act_b + w_b


def _step_bytes(tile, in_dim, hidden, out_dim):
    """Per-grid-step VMEM: double-buffered x/out tiles + live f32 activations."""
    return (2 * _round_up(in_dim, 8) * tile * 4
            + 2 * _round_up(out_dim, 8) * tile * 4
            + 2 * _round_up(hidden, 8) * tile * 4)


def _pick_batch_tile(batch, in_dim, hidden, out_dim, budget):
    """MiB-scale x tiles (review #4), VMEM-capped, even step count for v7x."""
    tile = 1024
    while (in_dim * tile * 4 < (1 << 20)                 # grow until ~1 MiB x DMA
           and tile < (1 << 16)
           and _step_bytes(2 * tile, in_dim, hidden, out_dim) <= budget // 2):
        tile *= 2
    while _step_bytes(tile, in_dim, hidden, out_dim) > budget // 2 and tile > 2 * _LANE:
        tile //= 2
    # v7x has 2 TensorCores: prefer an even number of "parallel" grid steps so
    # neither core idles on the tail.  No effect on v5e/v6e (1 TC).
    steps = pl.cdiv(batch, tile)
    if steps > 1 and steps % 2 == 1:
        tile = _round_up(pl.cdiv(batch, steps + 1), _LANE)
    return tile


def mlp_kernel(x_ref, w1_ref, b1_ref, w2_ref, b2_ref, w3_ref, b3_ref, o_ref):
    """Fused 3-layer MLP on a transposed batch tile.

    x_ref:  [in_dim,  T]     (T = batch tile, on the 128-lane axis)
    wN_ref: [out_N, in_N]    (PyTorch-native Linear layout)
    bN_ref: [out_N, 1]
    o_ref:  [out_dim, T]     lane-dense output block
    """
    in_dim = x_ref.shape[0]

    if in_dim <= _TINY_K:
        # Review #10: K=in_dim is far below the MXU tile -> layer 1 as in_dim
        # VPU broadcast-FMAs ([H,1] x [1,T] outer products); MXU stays free.
        x = x_ref[...].astype(jnp.float32)
        w1 = w1_ref[...].astype(jnp.float32)
        h1 = b1_ref[...] + w1[:, 0:1] * x[0:1, :]
        for k in range(1, in_dim):
            h1 = h1 + w1[:, k:k + 1] * x[k:k + 1, :]
    else:
        # Large in_dim: MXU path.  Cast x per-tile in-kernel (review #5);
        # accumulation stays f32 via preferred_element_type.
        x = x_ref[...].astype(w1_ref.dtype)
        h1 = jnp.dot(w1_ref[...], x, preferred_element_type=jnp.float32) + b1_ref[...]

    # ReLU in f32, then cast to the matmul-operand dtype (bf16 mode: review #9).
    h1 = jnp.maximum(h1, 0.0).astype(w2_ref.dtype)
    h2 = jnp.dot(w2_ref[...], h1, preferred_element_type=jnp.float32) + b2_ref[...]
    h2 = jnp.maximum(h2, 0.0).astype(w3_ref.dtype)

    z = jnp.dot(w3_ref[...], h2, preferred_element_type=jnp.float32) + b3_ref[...]
    o_ref[...] = jax.nn.sigmoid(z)   # f32 activation math; lane-dense store


def mlp_forward(x, params, *, batch_tile=None, use_bf16_matmul=False):
    """Forward pass of the 3-layer MLP.

    x: [B, input_dim] float32.
    params: dict layer -> (W, b); W in PyTorch layout [out, in], b is [out, 1].
    batch_tile: None = auto (VMEM-footprint picks gridless vs. tiled and sizes
      the tile); int = force the tiled path with that tile (multiple of 128).
    use_bf16_matmul: bf16 MXU operands (valid on v5e/v6e/v7x), f32 accumulation.
    """
    w1, b1 = params["layer_1"]
    w2, b2 = params["layer_2"]
    w3, b3 = params["layer_3"]
    B, in_dim = x.shape
    hidden = w1.shape[0]
    out_dim = w3.shape[0]

    if use_bf16_matmul:
        # Weights are tiny and grid-resident: cast once here.  x stays f32 in
        # HBM; any operand cast happens per-tile inside the kernel (review #5).
        w2 = w2.astype(jnp.bfloat16)
        w3 = w3.astype(jnp.bfloat16)
        if in_dim > _TINY_K:     # layer 1 only touches the MXU when K is non-tiny
            w1 = w1.astype(jnp.bfloat16)

    # One-time layout plumbing: put the batch on the lane axis.  Downstream,
    # the x tiles, h1/h2 intermediates and the output store are all lane-dense.
    x_t = x.T                                             # [in_dim, B]
    args = (x_t, w1, b1, w2, b2, w3, b3)
    budget = _vmem_budget_bytes()

    if batch_tile is None and _footprint_bytes(B, in_dim, hidden, out_dim) <= budget // 2:
        # Whole problem fits comfortably in VMEM: gridless single shot — no
        # pipeline prologue/epilogue, no per-step overhead, no double buffering.
        out_t = pl.pallas_call(
            mlp_kernel,
            out_shape=jax.ShapeDtypeStruct((out_dim, B), jnp.float32),
            in_specs=[pl.BlockSpec(memory_space=pltpu.MemorySpace.VMEM)] * 7,
            out_specs=pl.BlockSpec(memory_space=pltpu.MemorySpace.VMEM),
            compiler_params=pltpu.CompilerParams(vmem_limit_bytes=budget),
        )(*args)
    else:
        tile = batch_tile if batch_tile is not None else _pick_batch_tile(
            B, in_dim, hidden, out_dim, budget)
        assert tile % _LANE == 0, "batch_tile must be a multiple of 128"
        # Ragged tail handled by Pallas block masking: no jnp.pad, no out[:B].
        grid = (pl.cdiv(B, tile),)

        def resident_spec(shape):
            # Constant index_map across the grid -> resident, single-buffered.
            return pl.BlockSpec(
                shape, lambda i: (0,) * len(shape), pipeline_mode=pl.Buffered(1))

        out_t = pl.pallas_call(
            mlp_kernel,
            out_shape=jax.ShapeDtypeStruct((out_dim, B), jnp.float32),
            grid_spec=pltpu.PrefetchScalarGridSpec(
                num_scalar_prefetch=0,
                grid=grid,
                in_specs=[
                    pl.BlockSpec((in_dim, tile), lambda i: (0, i)),   # x tile
                    resident_spec(w1.shape), resident_spec(b1.shape),
                    resident_spec(w2.shape), resident_spec(b2.shape),
                    resident_spec(w3.shape), resident_spec(b3.shape),
                ],
                out_specs=pl.BlockSpec((out_dim, tile), lambda i: (0, i)),
            ),
            compiler_params=pltpu.CompilerParams(
                dimension_semantics=("parallel",),   # batch tiles shard across TCs
                vmem_limit_bytes=budget,             # explicit per-gen VMEM budget
            ),
        )(*args)

    # Undo the transpose in the wrapper (free reshape for out_dim == 1).
    if out_dim == 1:
        return out_t.reshape(B, 1)
    return out_t.T


def init_params(key, input_dim, hidden_dim, output_dim):
    """Matches the PyTorch module's init; weights kept in torch layout [out, in]:
    layer_1 weight: kaiming_uniform_(nonlinearity='relu') -> bound = sqrt(6/fan_in);
    other weights / all biases: torch Linear default -> bound = 1/sqrt(fan_in)."""
    k1, k2, k3, kb1, kb2, kb3 = jax.random.split(key, 6)

    def kaiming_uniform(k, fan_in, shape):
        bound = jnp.sqrt(2.0) * jnp.sqrt(3.0 / fan_in)
        return jax.random.uniform(k, shape, jnp.float32, -bound, bound)

    def default_uniform(k, fan_in, shape):
        bound = 1.0 / jnp.sqrt(fan_in)
        return jax.random.uniform(k, shape, jnp.float32, -bound, bound)

    w1 = kaiming_uniform(k1, input_dim, (hidden_dim, input_dim))
    b1 = default_uniform(kb1, input_dim, (hidden_dim, 1))
    w2 = default_uniform(k2, hidden_dim, (hidden_dim, hidden_dim))
    b2 = default_uniform(kb2, hidden_dim, (hidden_dim, 1))
    w3 = default_uniform(k3, hidden_dim, (output_dim, hidden_dim))
    b3 = default_uniform(kb3, hidden_dim, (output_dim, 1))
    return {"layer_1": (w1, b1), "layer_2": (w2, b2), "layer_3": (w3, b3)}


def reference_forward(x, params):
    w1, b1 = params["layer_1"]
    w2, b2 = params["layer_2"]
    w3, b3 = params["layer_3"]
    h = jnp.maximum(x @ w1.T + b1.T, 0.0)
    h = jnp.maximum(h @ w2.T + b2.T, 0.0)
    return jax.nn.sigmoid(h @ w3.T + b3.T)


if __name__ == "__main__":
    input_dim, hidden_dim, output_dim = 4, 32, 1

    key = jax.random.PRNGKey(0)
    kx_small, kx_big, kp = jax.random.split(key, 3)
    params = init_params(kp, input_dim, hidden_dim, output_dim)

    # 1) Tiny batch -> gridless single-shot path (VMEM-footprint check).
    x_small = jax.random.normal(kx_small, (8, input_dim), jnp.float32)
    out_small = jax.block_until_ready(mlp_forward(x_small, params))
    ref_small = reference_forward(x_small, params)
    assert out_small.shape == (8, output_dim)
    assert jnp.allclose(out_small, ref_small, atol=1e-5, rtol=1e-5)

    # 2) Ragged batch, forced tiled path: pl.cdiv grid (5 steps, masked last
    #    block), lane-dense [out_dim, tile] output stores, resident weights.
    x_big = jax.random.normal(kx_big, (1032, input_dim), jnp.float32)
    out_big = jax.block_until_ready(mlp_forward(x_big, params, batch_tile=256))
    ref_big = reference_forward(x_big, params)
    assert out_big.shape == (1032, output_dim)
    assert jnp.allclose(out_big, ref_big, atol=1e-5, rtol=1e-5)

    # 3) bf16-matmul path (valid on v5e/v6e/v7x), looser tolerance.
    out_bf16 = jax.block_until_ready(
        mlp_forward(x_big, params, batch_tile=256, use_bf16_matmul=True))
    assert out_bf16.shape == (1032, output_dim)
    assert jnp.allclose(out_bf16, ref_big, atol=2e-2, rtol=2e-2)

    print("KERNEL_OK")
</pallas_src>

<mosaic_0001>
module attributes {stable_mosaic.version = 11 : i64} {
  func.func @mlp_kernel(%arg0: memref<4x8xf32, #tpu.memory_space<vmem>>, %arg1: memref<32x4xf32, #tpu.memory_space<vmem>>, %arg2: memref<32x1xf32, #tpu.memory_space<vmem>>, %arg3: memref<32x32xf32, #tpu.memory_space<vmem>>, %arg4: memref<32x1xf32, #tpu.memory_space<vmem>>, %arg5: memref<1x32xf32, #tpu.memory_space<vmem>>, %arg6: memref<1x1xf32, #tpu.memory_space<vmem>>, %arg7: memref<1x8xf32, #tpu.memory_space<vmem>>) attributes {dimension_semantics = [], scalar_prefetch = 0 : i64, scratch_operands = 0 : i64, tpu.core_type = #tpu.core_type<tc>} {
    %c0 = arith.constant 0 : index
    %c0_0 = arith.constant 0 : index
    %0 = vector.load %arg0[%c0, %c0_0] : memref<4x8xf32, #tpu.memory_space<vmem>>, vector<4x8xf32>
    %c0_1 = arith.constant 0 : index
    %c0_2 = arith.constant 0 : index
    %1 = vector.load %arg1[%c0_1, %c0_2] : memref<32x4xf32, #tpu.memory_space<vmem>>, vector<32x4xf32>
    %c0_3 = arith.constant 0 : index
    %c0_4 = arith.constant 0 : index
    %2 = vector.load %arg2[%c0_3, %c0_4] : memref<32x1xf32, #tpu.memory_space<vmem>>, vector<32x1xf32>
    %3 = vector.extract_strided_slice %1 {offsets = [0, 0], sizes = [32, 1], strides = [1, 1]} : vector<32x4xf32> to vector<32x1xf32>
    %4 = vector.extract_strided_slice %0 {offsets = [0, 0], sizes = [1, 8], strides = [1, 1]} : vector<4x8xf32> to vector<1x8xf32>
    %5 = vector.broadcast %3 : vector<32x1xf32> to vector<32x8xf32>
    %6 = vector.broadcast %4 : vector<1x8xf32> to vector<32x8xf32>
    %7 = arith.mulf %5, %6 : vector<32x8xf32>
    %8 = vector.broadcast %2 : vector<32x1xf32> to vector<32x8xf32>
    %9 = arith.addf %8, %7 : vector<32x8xf32>
    %10 = vector.extract_strided_slice %1 {offsets = [0, 1], sizes = [32, 1], strides = [1, 1]} : vector<32x4xf32> to vector<32x1xf32>
    %11 = vector.extract_strided_slice %0 {offsets = [1, 0], sizes = [1, 8], strides = [1, 1]} : vector<4x8xf32> to vector<1x8xf32>
    %12 = vector.broadcast %10 : vector<32x1xf32> to vector<32x8xf32>
    %13 = vector.broadcast %11 : vector<1x8xf32> to vector<32x8xf32>
    %14 = arith.mulf %12, %13 : vector<32x8xf32>
    %15 = arith.addf %9, %14 : vector<32x8xf32>
    %16 = vector.extract_strided_slice %1 {offsets = [0, 2], sizes = [32, 1], strides = [1, 1]} : vector<32x4xf32> to vector<32x1xf32>
    %17 = vector.extract_strided_slice %0 {offsets = [2, 0], sizes = [1, 8], strides = [1, 1]} : vector<4x8xf32> to vector<1x8xf32>
    %18 = vector.broadcast %16 : vector<32x1xf32> to vector<32x8xf32>
    %19 = vector.broadcast %17 : vector<1x8xf32> to vector<32x8xf32>
    %20 = arith.mulf %18, %19 : vector<32x8xf32>
    %21 = arith.addf %15, %20 : vector<32x8xf32>
    %22 = vector.extract_strided_slice %1 {offsets = [0, 3], sizes = [32, 1], strides = [1, 1]} : vector<32x4xf32> to vector<32x1xf32>
    %23 = vector.extract_strided_slice %0 {offsets = [3, 0], sizes = [1, 8], strides = [1, 1]} : vector<4x8xf32> to vector<1x8xf32>
    %24 = vector.broadcast %22 : vector<32x1xf32> to vector<32x8xf32>
    %25 = vector.broadcast %23 : vector<1x8xf32> to vector<32x8xf32>
    %26 = arith.mulf %24, %25 : vector<32x8xf32>
    %27 = arith.addf %21, %26 : vector<32x8xf32>
    %cst = arith.constant 0.000000e+00 : f32
    %28 = vector.broadcast %cst : f32 to vector<32x8xf32>
    %29 = arith.maximumf %27, %28 : vector<32x8xf32>
    %c0_5 = arith.constant 0 : index
    %c0_6 = arith.constant 0 : index
    %30 = vector.load %arg3[%c0_5, %c0_6] : memref<32x32xf32, #tpu.memory_space<vmem>>, vector<32x32xf32>
    %cst_7 = arith.constant dense<0.000000e+00> : vector<32x8xf32>
    %31 = tpu.matmul %30, %29, %cst_7 {dimension_numbers = #tpu.dot_dimension_numbers<[1], [0], [0], [1], [0, 0, 1, 1], [], []>} : vector<32x32xf32>, vector<32x8xf32>, vector<32x8xf32> -> vector<32x8xf32>
    %c0_8 = arith.constant 0 : index
    %c0_9 = arith.constant 0 : index
    %32 = vector.load %arg4[%c0_8, %c0_9] : memref<32x1xf32, #tpu.memory_space<vmem>>, vector<32x1xf32>
    %33 = vector.broadcast %32 : vector<32x1xf32> to vector<32x8xf32>
    %34 = arith.addf %31, %33 : vector<32x8xf32>
    %cst_10 = arith.constant 0.000000e+00 : f32
    %35 = vector.broadcast %cst_10 : f32 to vector<32x8xf32>
    %36 = arith.maximumf %34, %35 : vector<32x8xf32>
    %c0_11 = arith.constant 0 : index
    %c0_12 = arith.constant 0 : index
    %37 = vector.load %arg5[%c0_11, %c0_12] : memref<1x32xf32, #tpu.memory_space<vmem>>, vector<1x32xf32>
    %cst_13 = arith.constant dense<0.000000e+00> : vector<1x8xf32>
    %38 = tpu.matmul %37, %36, %cst_13 {dimension_numbers = #tpu.dot_dimension_numbers<[1], [0], [0], [1], [0, 0, 1, 1], [], []>} : vector<1x32xf32>, vector<32x8xf32>, vector<1x8xf32> -> vector<1x8xf32>
    %c0_14 = arith.constant 0 : index
    %c0_15 = arith.constant 0 : index
    %39 = vector.load %arg6[%c0_14, %c0_15] : memref<1x1xf32, #tpu.memory_space<vmem>>, vector<1x1xf32>
    %40 = vector.broadcast %39 : vector<1x1xf32> to vector<1x8xf32>
    %41 = arith.addf %38, %40 : vector<1x8xf32>
    %42 = arith.negf %41 : vector<1x8xf32>
    %43 = math.exp %42 : vector<1x8xf32>
    %cst_16 = arith.constant 1.000000e+00 : f32
    %44 = vector.broadcast %cst_16 : f32 to vector<1x8xf32>
    %45 = arith.addf %44, %43 : vector<1x8xf32>
    %46 = arith.divf %44, %45 : vector<1x8xf32>
    %c0_17 = arith.constant 0 : index
    %c0_18 = arith.constant 0 : index
    %47 = vector.load %arg7[%c0_17, %c0_18] : memref<1x8xf32, #tpu.memory_space<vmem>>, vector<1x8xf32>
    tpu.vector_store %arg7[%c0_17, %c0_18], %46 {strides = array<i32>} : memref<1x8xf32, #tpu.memory_space<vmem>>, vector<1x8xf32>,
    return
  }
}

</mosaic_0001>

<llo_original>
// kernel: tpu_custom_call.1
$region0: #{tpu_custom_call.1}
  #allocation0 [shape = 'u32[]', space=smem, size = 0x4, offset = 0x4, fixed_abs, tag = 'smem constant byte address 0x4 - core index']
  #allocation1 [shape = 'u32[144,128]{1,0:T(1,128)}', space=vmem, size = 0x12000, scoped, tag = 'internal scratch']
  #allocation2 [shape = 'f32[1,1]{1,0:T(1,128)S(1)}', space=vmem, size = 0x200, scoped, tag = 'scoped memory for tpu_custom_call.1']
  %s0 = inlined_call_operand.vmem [shape: f32[4,8], index: 0, kind: input, shape index: {}]
  %s1 = inlined_call_operand.vmem [shape: f32[32,4], index: 1, kind: input, shape index: {}]
  %s2 = inlined_call_operand.vmem [shape: f32[32,1], index: 2, kind: input, shape index: {}]
  %s3 = inlined_call_operand.vmem [shape: f32[32,32], index: 3, kind: input, shape index: {}]
  %s4 = inlined_call_operand.vmem [shape: f32[32,1], index: 4, kind: input, shape index: {}]
  %s5 = inlined_call_operand.vmem [shape: f32[1,32], index: 5, kind: input, shape index: {}]
  %s6 = inlined_call_operand.<no memory space> [shape: f32[1,1], index: 6, kind: input, shape index: {}]
  %s7 = inlined_call_operand.hbm [shape: f32[1,8], index: 7, kind: output, shape index: {}]
  %s8 = sld [smem:[#allocation0]]
  $region38: #{tpu_custom_call.1} parent=0
    _
  %s10 = ssub.s32 1, %s8
  %s11 = scalar_select 0, %s10, %s8
  %v12 = vstv %s6
  %13 = vst [vmem:[#allocation2] sm:$0x1] %v12
  $region1: #{tpu_custom_call.1} parent=0
    #allocation3 [shape = 'u8[512]{0}', space=vmem, size = 0x400, scoped, tag = 'output window, operand 0, single buffered']
    #allocation4 [shape = 's32[1]{0}', space=sflag, size = 0x4, scoped, tag = 'scoped memory for tpu_custom_call.1']
    %14 = vsyncpa [#allocation4], 0
    // Predicated region
    $region2: #{tpu_custom_call.1} parent=1 // pred_check
      _
    $region3: #{tpu_custom_call.1} parent=1 // pred_check_branch
      %16 = sbr.rel (0) target = $region5
    $region4: #{tpu_custom_call.1} parent=1 // pred_region
      _
    $region5: #{tpu_custom_call.1} parent=1 // pred_fallthru
      _
    // Predicated region
    $region6: #{tpu_custom_call.1} parent=1 // pred_check
      _
    $region7: #{tpu_custom_call.1} parent=1 // pred_check_branch
      %18 = sbr.rel (0) target = $region9
    $region8: #{tpu_custom_call.1} parent=1 // pred_region
      _
    $region9: #{tpu_custom_call.1} parent=1 // pred_fallthru
      _
    // Predicated region
    $region10: #{tpu_custom_call.1} parent=1 // pred_check
      _
    $region11: #{tpu_custom_call.1} parent=1 // pred_check_branch
      %20 = sbr.rel (0) target = $region13
    $region12: #{tpu_custom_call.1} parent=1 // pred_region
      _
    $region13: #{tpu_custom_call.1} parent=1 // pred_fallthru
      _
    // Predicated region
    $region14: #{tpu_custom_call.1} parent=1 // pred_check
      _
    $region15: #{tpu_custom_call.1} parent=1 // pred_check_branch
      %22 = sbr.rel (0) target = $region17
    $region16: #{tpu_custom_call.1} parent=1 // pred_region
      _
    $region17: #{tpu_custom_call.1} parent=1 // pred_fallthru
      _
    // Predicated region
    $region18: #{tpu_custom_call.1} parent=1 // pred_check
      _
    $region19: #{tpu_custom_call.1} parent=1 // pred_check_branch
      %24 = sbr.rel (0) target = $region21
    $region20: #{tpu_custom_call.1} parent=1 // pred_region
      _
    $region21: #{tpu_custom_call.1} parent=1 // pred_fallthru
      _
    // Predicated region
    $region22: #{tpu_custom_call.1} parent=1 // pred_check
      _
    $region23: #{tpu_custom_call.1} parent=1 // pred_check_branch
      %26 = sbr.rel (0) target = $region25
    $region24: #{tpu_custom_call.1} parent=1 // pred_region
      _
    $region25: #{tpu_custom_call.1} parent=1 // pred_fallthru
      _
    // Predicated region
    $region26: #{tpu_custom_call.1} parent=1 // pred_check
      _
    $region27: #{tpu_custom_call.1} parent=1 // pred_check_branch
      %28 = sbr.rel (0) target = $region29
    $region28: #{tpu_custom_call.1} parent=1 // pred_region
      _
    $region29: #{tpu_custom_call.1} parent=1 // pred_fallthru
      _
    %v29 = vld [vmem:[%s0] sm:$0xf]
    %v30 = vld [vmem:[%s1] sm:$0xff]
    %v31 = vld [vmem:[%s1 + $0x8] sm:$0xff]
    %v32 = vld [vmem:[%s1 + $0x10] sm:$0xff]
    %v33 = vld [vmem:[%s1 + $0x18] sm:$0xff]
    %v34 = vld [vmem:[%s2] sm:$0xff]
    %v35 = vld [vmem:[%s2 + $0x8] sm:$0xff]
    %v36 = vld [vmem:[%s2 + $0x10] sm:$0xff]
    %v37 = vld [vmem:[%s2 + $0x18] sm:$0xff]
    %39 = vset.pattern.permute.xlu0 0
    %40 = vperm.xlu0 %39, %v30
    %v41 = vpop.permute.xlu0 %40
    %44 = vset.pattern.permute.xlu0 0
    %45 = vperm.xlu0 %44, %v31
    %v46 = vpop.permute.xlu0 %45
    %49 = vset.pattern.permute.xlu0 0
    %50 = vperm.xlu0 %49, %v32
    %v51 = vpop.permute.xlu0 %50
    %54 = vset.pattern.permute.xlu0 0
    %55 = vperm.xlu0 %54, %v33
    %v56 = vpop.permute.xlu0 %55
    %v58 = vlaneseq
    %v59 = vshrl.u32 %v58, 7
    %v60 = vsub.s32 0, %v59
    %v61 = vrot.slane %v29, %v60
    %v62 = vmul.f32 %v41, %v61
    %v63 = vmul.f32 %v46, %v61
    %v64 = vmul.f32 %v51, %v61
    %v65 = vmul.f32 %v56, %v61
    %67 = vset.pattern.permute.xlu0 0
    %68 = vperm.xlu0 %67, %v34
    %v69 = vpop.permute.xlu0 %68
    %72 = vset.pattern.permute.xlu0 0
    %73 = vperm.xlu0 %72, %v35
    %v74 = vpop.permute.xlu0 %73
    %77 = vset.pattern.permute.xlu0 0
    %78 = vperm.xlu0 %77, %v36
    %v79 = vpop.permute.xlu0 %78
    %82 = vset.pattern.permute.xlu0 0
    %83 = vperm.xlu0 %82, %v37
    %v84 = vpop.permute.xlu0 %83
    %v86 = vadd.f32 %v69, %v62
    %v87 = vadd.f32 %v74, %v63
    %v88 = vadd.f32 %v79, %v64
    %v89 = vadd.f32 %v84, %v65
    %90 = vset.pattern.permute.xlu0 1
    %91 = vperm.xlu0 %90, %v30
    %v92 = vpop.permute.xlu0 %91
    %94 = vset.pattern.permute.xlu0 1
    %95 = vperm.xlu0 %94, %v31
    %v96 = vpop.permute.xlu0 %95
    %98 = vset.pattern.permute.xlu0 1
    %99 = vperm.xlu0 %98, %v32
    %v100 = vpop.permute.xlu0 %99
    %102 = vset.pattern.permute.xlu0 1
    %103 = vperm.xlu0 %102, %v33
    %v104 = vpop.permute.xlu0 %103
    %v106 = vlaneseq
    %v107 = vshrl.u32 %v106, 7
    %v108 = vsub.s32 1, %v107
    %v109 = vrot.slane %v29, %v108
    %v110 = vmul.f32 %v92, %v109
    %v111 = vmul.f32 %v96, %v109
    %v112 = vmul.f32 %v100, %v109
    %v113 = vmul.f32 %v104, %v109
    %v114 = vadd.f32 %v86, %v110
    %v115 = vadd.f32 %v87, %v111
    %v116 = vadd.f32 %v88, %v112
    %v117 = vadd.f32 %v89, %v113
    %118 = vset.pattern.permute.xlu0 2
    %119 = vperm.xlu0 %118, %v30
    %v120 = vpop.permute.xlu0 %119
    %122 = vset.pattern.permute.xlu0 2
    %123 = vperm.xlu0 %122, %v31
    %v124 = vpop.permute.xlu0 %123
    %126 = vset.pattern.permute.xlu0 2
    %127 = vperm.xlu0 %126, %v32
    %v128 = vpop.permute.xlu0 %127
    %130 = vset.pattern.permute.xlu0 2
    %131 = vperm.xlu0 %130, %v33
    %v132 = vpop.permute.xlu0 %131
    %v134 = vlaneseq
    %v135 = vshrl.u32 %v134, 7
    %v136 = vsub.s32 2, %v135
    %v137 = vrot.slane %v29, %v136
    %v138 = vmul.f32 %v120, %v137
    %v139 = vmul.f32 %v124, %v137
    %v140 = vmul.f32 %v128, %v137
    %v141 = vmul.f32 %v132, %v137
    %v142 = vadd.f32 %v114, %v138
    %v143 = vadd.f32 %v115, %v139
    %v144 = vadd.f32 %v116, %v140
    %v145 = vadd.f32 %v117, %v141
    %146 = vset.pattern.permute.xlu0 3
    %147 = vperm.xlu0 %146, %v30
    %v148 = vpop.permute.xlu0 %147
    %150 = vset.pattern.permute.xlu0 3
    %151 = vperm.xlu0 %150, %v31
    %v152 = vpop.permute.xlu0 %151
    %154 = vset.pattern.permute.xlu0 3
    %155 = vperm.xlu0 %154, %v32
    %v156 = vpop.permute.xlu0 %155
    %158 = vset.pattern.permute.xlu0 3
    %159 = vperm.xlu0 %158, %v33
    %v160 = vpop.permute.xlu0 %159
    %v162 = vlaneseq
    %v163 = vshrl.u32 %v162, 7
    %v164 = vsub.s32 3, %v163
    %v165 = vrot.slane %v29, %v164
    %v166 = vmul.f32 %v148, %v165
    %v167 = vmul.f32 %v152, %v165
    %v168 = vmul.f32 %v156, %v165
    %v169 = vmul.f32 %v160, %v165
    %v170 = vadd.f32 %v142, %v166
    %v171 = vadd.f32 %v143, %v167
    %v172 = vadd.f32 %v144, %v168
    %v173 = vadd.f32 %v145, %v169
    %v174 = vmax.f32 %v170, 0.0
    %v175 = vmax.f32 %v171, 0.0
    %v176 = vmax.f32 %v172, 0.0
    %v177 = vmax.f32 %v173, 0.0
    %v178 = vld [vmem:[%s3] sm:$0xff]
    %v179 = vld [vmem:[%s3 + $0x8] sm:$0xff]
    %v180 = vld [vmem:[%s3 + $0x10] sm:$0xff]
    %v181 = vld [vmem:[%s3 + $0x18] sm:$0xff]
    %v182 = vld [vmem:[%s4] sm:$0xff]
    %v183 = vld [vmem:[%s4 + $0x8] sm:$0xff]
    %v184 = vld [vmem:[%s4 + $0x10] sm:$0xff]
    %v185 = vld [vmem:[%s4 + $0x18] sm:$0xff]
    %187 = vset.pattern.permute.xlu0 0
    %188 = vperm.xlu0 %187, %v182
    %v189 = vpop.permute.xlu0 %188
    %192 = vset.pattern.permute.xlu0 0
    %193 = vperm.xlu0 %192, %v183
    %v194 = vpop.permute.xlu0 %193
    %197 = vset.pattern.permute.xlu0 0
    %198 = vperm.xlu0 %197, %v184
    %v199 = vpop.permute.xlu0 %198
    %202 = vset.pattern.permute.xlu0 0
    %203 = vperm.xlu0 %202, %v185
    %v204 = vpop.permute.xlu0 %203
    %vm206 = vcmask 261120
    %v208 = vsel %vm206, %v178, 0
    %v211 = vsel %vm206, %v179, 0
    %v214 = vsel %vm206, %v180, 0
    %v217 = vsel %vm206, %v181, 0
    %219 = vmatprep.subr.mxu0 0.0
    %220 = vmatpush1.msra.mxu0 %v174
    %221 = vmatprep.subr.mxu0 0.0
    %222 = vmatpush1.msra.mxu0 %v175
    %223 = vmatprep.subr.mxu0 0.0
    %224 = vmatpush1.msra.mxu0 %v176
    %225 = vmatprep.subr.mxu0 0.0
    %226 = vmatpush1.msra.mxu0 %v177
    %227 = vmatprep.subr.mxu0 0.0
    %228 = vmatpush1.msra.mxu0 0.0
    %229 = vmatprep.subr.mxu0 0.0
    %230 = vmatpush1.msra.mxu0 0.0
    %231 = vmatprep.subr.mxu0 0.0
    %232 = vmatpush1.msra.mxu0 0.0
    %233 = vmatprep.subr.mxu0 0.0
    %234 = vmatpush1.msra.mxu0 0.0
    %235 = vmatprep.subr.mxu0 0.0
    %236 = vmatpush1.msra.mxu0 0.0
    %237 = vmatprep.subr.mxu0 0.0
    %238 = vmatpush1.msra.mxu0 0.0
    %239 = vmatprep.subr.mxu0 0.0
    %240 = vmatpush1.msra.mxu0 0.0
    %241 = vmatprep.subr.mxu0 0.0
    %242 = vmatpush1.msra.mxu0 0.0
    %243 = vmatprep.subr.mxu0 0.0
    %244 = vmatpush1.msra.mxu0 0.0
    %245 = vmatprep.subr.mxu0 0.0
    %246 = vmatpush1.msra.mxu0 0.0
    %247 = vmatprep.subr.mxu0 0.0
    %248 = vmatpush1.msra.mxu0 0.0
    %249 = vmatprep.subr.mxu0 0.0
    %250 = vmatpush1.msra.mxu0 0.0
    %251 = vmatprep.subr.mxu0 0.0
    %252 = vmatpush1.msra.mxu0 0.0
    %253 = vmatprep.subr.mxu0 0.0
    %254 = vmatpush1.msra.mxu0 0.0
    %255 = vmatprep.subr.mxu0 0.0
    %256 = vmatpush1.msra.mxu0 0.0
    %257 = vmatprep.subr.mxu0 0.0
    %258 = vmatpush1.msra.mxu0 0.0
    %259 = vmatprep.subr.mxu0 0.0
    %260 = vmatpush1.msra.mxu0 0.0
    %261 = vmatprep.subr.mxu0 0.0
    %262 = vmatpush1.msra.mxu0 0.0
    %263 = vmatprep.subr.mxu0 0.0
    %264 = vmatpush1.msra.mxu0 0.0
    %265 = vmatprep.subr.mxu0 0.0
    %266 = vmatpush1.msra.mxu0 0.0
    %267 = vmatprep.subr.mxu0 0.0
    %268 = vmatpush1.msra.mxu0 0.0
    %269 = vmatprep.subr.mxu0 0.0
    %270 = vmatpush1.msra.mxu0 0.0
    %271 = vmatprep.subr.mxu0 0.0
    %272 = vmatpush1.msra.mxu0 0.0
    %273 = vmatprep.subr.mxu0 0.0
    %274 = vmatpush1.msra.mxu0 0.0
    %275 = vmatprep.subr.mxu0 0.0
    %276 = vmatpush1.msra.mxu0 0.0
    %277 = vmatprep.subr.mxu0 0.0
    %278 = vmatpush1.msra.mxu0 0.0
    %279 = vmatprep.subr.mxu0 0.0
    %280 = vmatpush1.msra.mxu0 0.0
    %281 = vmatprep.subr.mxu0 0.0
    %282 = vmatpush1.msra.mxu0 0.0
    %283 = vmatprep.mubr.f32.mxu0 0.0
    %284 = vmatmul.mubr.f32.gmra.mrb[0].mxu0 %v208
    %v285 = vpop.f32.mrb[0].mxu0
    %v286 = vadd.f32 %v189, %v285
    %v287 = vpop.f32.mrb[0].mxu0
    %288 = vmatprep.mubr.f32.mxu0 0.0
    %289 = vmatmul.mubr.f32.gmra.mrb[0].mxu0 %v211
    %v290 = vpop.f32.mrb[0].mxu0
    %v291 = vadd.f32 %v194, %v290
    %v292 = vpop.f32.mrb[0].mxu0
    %293 = vmatprep.mubr.f32.mxu0 0.0
    %294 = vmatmul.mubr.f32.gmra.mrb[0].mxu0 %v214
    %v295 = vpop.f32.mrb[0].mxu0
    %v296 = vadd.f32 %v199, %v295
    %v297 = vpop.f32.mrb[0].mxu0
    %298 = vmatprep.mubr.f32.mxu0 0.0
    %299 = vmatmul.mubr.f32.gmra.mrb[0].mxu0 %v217
    %v300 = vpop.f32.mrb[0].mxu0
    %v301 = vadd.f32 %v204, %v300
    %v302 = vpop.f32.mrb[0].mxu0
    %303 = vdwg.mxu0
    %v304 = vmax.f32 %v286, 0.0
    %v305 = vmax.f32 %v291, 0.0
    %v306 = vmax.f32 %v296, 0.0
    %v307 = vmax.f32 %v301, 0.0
    %v308 = vld [vmem:[%s5] sm:$0x1]
    %v309 = vld [vmem:[#allocation2] sm:$0x1]
    %311 = vset.pattern.permute.xlu0 0
    %312 = vperm.xlu0 %311, %v309
    %v313 = vpop.permute.xlu0 %312
    %v315 = vlaneseq
    %v316 = vshrl.u32 %v315, 7
    %v317 = vsub.s32 0, %v316
    %v318 = vrot.slane %v313, %v317
    %v320 = vsel %vm206, %v308, 0
    %322 = vmatprep.subr.mxu0 0.0
    %323 = vmatpush1.msra.mxu0 %v304
    %324 = vmatprep.subr.mxu0 0.0
    %325 = vmatpush1.msra.mxu0 %v305
    %326 = vmatprep.subr.mxu0 0.0
    %327 = vmatpush1.msra.mxu0 %v306
    %328 = vmatprep.subr.mxu0 0.0
    %329 = vmatpush1.msra.mxu0 %v307
    %330 = vmatprep.subr.mxu0 0.0
    %331 = vmatpush1.msra.mxu0 0.0
    %332 = vmatprep.subr.mxu0 0.0
    %333 = vmatpush1.msra.mxu0 0.0
    %334 = vmatprep.subr.mxu0 0.0
    %335 = vmatpush1.msra.mxu0 0.0
    %336 = vmatprep.subr.mxu0 0.0
    %337 = vmatpush1.msra.mxu0 0.0
    %338 = vmatprep.subr.mxu0 0.0
    %339 = vmatpush1.msra.mxu0 0.0
    %340 = vmatprep.subr.mxu0 0.0
    %341 = vmatpush1.msra.mxu0 0.0
    %342 = vmatprep.subr.mxu0 0.0
    %343 = vmatpush1.msra.mxu0 0.0
    %344 = vmatprep.subr.mxu0 0.0
    %345 = vmatpush1.msra.mxu0 0.0
    %346 = vmatprep.subr.mxu0 0.0
    %347 = vmatpush1.msra.mxu0 0.0
    %348 = vmatprep.subr.mxu0 0.0
    %349 = vmatpush1.msra.mxu0 0.0
    %350 = vmatprep.subr.mxu0 0.0
    %351 = vmatpush1.msra.mxu0 0.0
    %352 = vmatprep.subr.mxu0 0.0
    %353 = vmatpush1.msra.mxu0 0.0
    %354 = vmatprep.subr.mxu0 0.0
    %355 = vmatpush1.msra.mxu0 0.0
    %356 = vmatprep.subr.mxu0 0.0
    %357 = vmatpush1.msra.mxu0 0.0
    %358 = vmatprep.subr.mxu0 0.0
    %359 = vmatpush1.msra.mxu0 0.0
    %360 = vmatprep.subr.mxu0 0.0
    %361 = vmatpush1.msra.mxu0 0.0
    %362 = vmatprep.subr.mxu0 0.0
    %363 = vmatpush1.msra.mxu0 0.0
    %364 = vmatprep.subr.mxu0 0.0
    %365 = vmatpush1.msra.mxu0 0.0
    %366 = vmatprep.subr.mxu0 0.0
    %367 = vmatpush1.msra.mxu0 0.0
    %368 = vmatprep.subr.mxu0 0.0
    %369 = vmatpush1.msra.mxu0 0.0
    %370 = vmatprep.subr.mxu0 0.0
    %371 = vmatpush1.msra.mxu0 0.0
    %372 = vmatprep.subr.mxu0 0.0
    %373 = vmatpush1.msra.mxu0 0.0
    %374 = vmatprep.subr.mxu0 0.0
    %375 = vmatpush1.msra.mxu0 0.0
    %376 = vmatprep.subr.mxu0 0.0
    %377 = vmatpush1.msra.mxu0 0.0
    %378 = vmatprep.subr.mxu0 0.0
    %379 = vmatpush1.msra.mxu0 0.0
    %380 = vmatprep.subr.mxu0 0.0
    %381 = vmatpush1.msra.mxu0 0.0
    %382 = vmatprep.subr.mxu0 0.0
    %383 = vmatpush1.msra.mxu0 0.0
    %384 = vmatprep.subr.mxu0 0.0
    %385 = vmatpush1.msra.mxu0 0.0
    %386 = vmatprep.mubr.f32.mxu0 0.0
    %387 = vmatmul.mubr.f32.gmra.mrb[0].mxu0 %v320
    %v388 = vpop.f32.mrb[0].mxu0
    %v389 = vadd.f32 %v318, %v388
    %v390 = vpop.f32.mrb[0].mxu0
    %391 = vdwg.mxu0
    %v392 = vxor.u32 %v389, 2147483648
    %v393 = vmul.f32 %v392, 1.442695
    %v394 = vpow.pop %v393
    %v395 = vadd.f32 %v394, 1.0
    %v396 = vrcp.pop %v395
    %v397 = vmul.f32 1.0, %v396
    %vm398 = vcmask 57344
    %399 = vst.msk [vmem:[#allocation3] sm:$0x1] %vm398, %v397
    // Predicated region
    $region30: #{tpu_custom_call.1} parent=1 // pred_check
      _
    $region31: #{tpu_custom_call.1} parent=1 // pred_check_branch
      %401 = sbr.rel (0) target = $region33
    $region32: #{tpu_custom_call.1} parent=1 // pred_region
      %s403 = ssub.s32 16, 16
      %404 = vsyncadd [#allocation4], %s403
      %s406 = sshll.u32 [#allocation3], 4
      %s407 = int_to_ptr.vmem [resolvable:$true] %s406
      %409 = dma.vmem_to_hbm [thread:$0]  %s407, 16, %s7, [#allocation4]
    $region33: #{tpu_custom_call.1} parent=1 // pred_fallthru
      _
    // Predicated region
    $region34: #{tpu_custom_call.1} parent=1 // pred_check
      _
    $region35: #{tpu_custom_call.1} parent=1 // pred_check_branch
      %411 = sbr.rel (0) target = $region37
    $region36: #{tpu_custom_call.1} parent=1 // pred_region
      %412 = dma.done [#allocation4], 16
    $region37: #{tpu_custom_call.1} parent=1 // pred_fallthru
      _
    %413 = vsyncpa [#allocation4], 1

</llo_original>
